<compile_context>
chip_gen: v7x
topology: tpu7x:2x2x1
jax: 0.10.0
libtpu: 0.0.40
codegen_flags: <defaults>
</compile_context>

<pallas_src>
import functools

import jax
import jax.numpy as jnp
from jax.experimental import pallas as pl
from jax.experimental.pallas import tpu as pltpu


def _round_up(x, m):
    return ((x + m - 1) // m) * m


# ---------------------------------------------------------------------------
# Kernels (all matmuls: bf16 x bf16 on the MXU, f32 accumulation)
# ---------------------------------------------------------------------------

def _all_exits_kernel(x_ref,
                      w0_ref, b0_ref,       # backbone part0
                      w1e0_ref, b1e0_ref,   # [part1 | exit0] fused  (on h0)
                      w12_ref, b12_ref,     # [exit1 | final exit] fused (on h1)
                      out_ref,              # (TB, 3*C_pad) lane-dense slab
                      *, hidden_pad):
    Hp = hidden_pad

    # stage 0: Linear + ReLU  (x already bf16; f32 accumulation)
    h0 = jnp.dot(x_ref[...], w0_ref[...], preferred_element_type=jnp.float32)
    h0 = jnp.maximum(h0 + b0_ref[...], 0.0)

    # stage 1 + exit 0 fused: one (H, H+C) MXU push on h0
    t = jnp.dot(h0.astype(jnp.bfloat16), w1e0_ref[...],
                preferred_element_type=jnp.float32) + b1e0_ref[...]
    h1 = jnp.maximum(t[:, :Hp], 0.0)        # part1 output (ReLU)
    out0 = t[:, Hp:]                        # exit0 logits (bias already added)

    # exit 1 + final exit fused: one (H, 2C) MXU push on h1
    out12 = jnp.dot(h1.astype(jnp.bfloat16), w12_ref[...],
                    preferred_element_type=jnp.float32) + b12_ref[...]

    # single unmasked full-tile store: [out0 | out1 | out2], all 128-aligned
    out_ref[...] = jnp.concatenate([out0, out12], axis=-1)


def _single_exit_shallow_kernel(x_ref, w0_ref, b0_ref, we_ref, be_ref, out_ref):
    """exit_chosen == 0: part0 + exit0 only."""
    h0 = jnp.maximum(
        jnp.dot(x_ref[...], w0_ref[...], preferred_element_type=jnp.float32)
        + b0_ref[...], 0.0)
    out_ref[...] = (jnp.dot(h0.astype(jnp.bfloat16), we_ref[...],
                            preferred_element_type=jnp.float32) + be_ref[...])


def _single_exit_deep_kernel(x_ref, w0_ref, b0_ref, w1_ref, b1_ref,
                             we_ref, be_ref, out_ref):
    """exit_chosen in {1, 2}: part0 + part1 + chosen exit head."""
    h0 = jnp.maximum(
        jnp.dot(x_ref[...], w0_ref[...], preferred_element_type=jnp.float32)
        + b0_ref[...], 0.0)
    h1 = jnp.maximum(
        jnp.dot(h0.astype(jnp.bfloat16), w1_ref[...],
                preferred_element_type=jnp.float32) + b1_ref[...], 0.0)
    out_ref[...] = (jnp.dot(h1.astype(jnp.bfloat16), we_ref[...],
                            preferred_element_type=jnp.float32) + be_ref[...])


# ---------------------------------------------------------------------------
# Host-side parameter preparation (pad to MXU/lane multiples, fuse exit heads)
# ---------------------------------------------------------------------------

def prepare_params(params):
    """One-time host-side prep: bf16 cast, 128-padding, exit-head fusion."""
    D, H = params["w0"].shape
    C = params["we0"].shape[1]
    Dp, Hp, Cp = _round_up(D, 128), _round_up(H, 128), _round_up(C, 128)

    def padw(w, rows, cols):
        w = w.astype(jnp.bfloat16)
        return jnp.pad(w, ((0, rows - w.shape[0]), (0, cols - w.shape[1])))

    def padb(b, cols):
        b = b.astype(jnp.float32).reshape(1, -1)
        return jnp.pad(b, ((0, 0), (0, cols - b.shape[1])))

    w0p, b0p = padw(params["w0"], Dp, Hp), padb(params["b0"], Hp)
    w1p, b1p = padw(params["w1"], Hp, Hp), padb(params["b1"], Hp)
    we0p, be0p = padw(params["we0"], Hp, Cp), padb(params["be0"], Cp)
    we1p, be1p = padw(params["we1"], Hp, Cp), padb(params["be1"], Cp)
    w2p, b2p = padw(params["w2"], Hp, Cp), padb(params["b2"], Cp)

    return {
        "dims": (D, H, C, Dp, Hp, Cp),
        "w0": w0p, "b0": b0p, "w1": w1p, "b1": b1p,
        "we0": we0p, "be0": be0p, "we1": we1p, "be1": be1p,
        "w2": w2p, "b2": b2p,
        # stage-1 + exit-0 fused into one (Hp, Hp+Cp) matmul on h0
        "w1e0": jnp.concatenate([w1p, we0p], axis=1),
        "b1e0": jnp.concatenate([b1p, be0p], axis=1),
        # exit-1 + final exit fused into one (Hp, 2*Cp) matmul on h1
        "w12": jnp.concatenate([we1p, w2p], axis=1),
        "b12": jnp.concatenate([be1p, b2p], axis=1),
    }


# ---------------------------------------------------------------------------
# Tiling / VMEM budgeting (generation-aware)
# ---------------------------------------------------------------------------

def _pick_tiling_and_vmem(B, Dp, Hp, Cp, max_batch_tile):
    try:
        info = pltpu.get_tpu_info()
        phys = getattr(info, "vmem_capacity_bytes", None) or (64 << 20)
    except Exception:
        phys = 64 << 20                       # conservative (v7x per-TensorCore)
    cap = min(int(phys * 0.85), 100 << 20)    # leave headroom under physical

    # resident weights (bf16) / biases (f32); x2 in case single-buffering the
    # constant specs is not honored by this jax build.
    w_bytes = 2 * (Dp * Hp + Hp * (Hp + Cp) + Hp * 2 * Cp)
    b_bytes = 4 * (Hp + (Hp + Cp) + 2 * Cp)
    const_bytes = 2 * (w_bytes + b_bytes)

    TB = min(max_batch_tile, _round_up(max(B, 8), 8))
    TB = _round_up(TB, 8)
    while True:
        tile_bytes = (2 * 2 * TB * Dp                 # x tile, bf16, dbl-buffered
                      + 2 * 4 * TB * 3 * Cp           # out tile, f32, dbl-buffered
                      + 4 * TB * (Hp + Hp + Cp)       # h0 + fused t (f32)
                      + 2 * TB * 2 * Hp)              # bf16 copies of h0 / h1
        need = int((const_bytes + tile_bytes) * 1.3) + (1 << 20)
        if need <= cap or TB <= 8:
            break
        TB = max(8, TB // 2)
    # TODO(synk): if resident weights alone exceed the VMEM cap (very large H,
    # esp. v7x's 64 MiB/TC), add a K-reduction grid axis with a VMEM accumulator
    # instead of raising the limit.
    vmem_limit = min(cap, max(need, 32 << 20))
    return TB, vmem_limit


# ---------------------------------------------------------------------------
# Wrapper
# ---------------------------------------------------------------------------

def early_exit_forward(x, prep, exit_chosen=None, *, max_batch_tile=512):
    """Pallas implementation of EarlyExitNetwork.forward.

    x: (B, D) float32.  prep: output of prepare_params.
    Returns (B, 3, C) when exit_chosen is None, else (B, C).
    """
    D, H, C, Dp, Hp, Cp = prep["dims"]
    B = x.shape[0]

    TB, vmem_limit = _pick_tiling_and_vmem(B, Dp, Hp, Cp, max_batch_tile)
    B_pad = _round_up(max(B, TB), TB)

    # bf16 x stream, zero-padded rows (sublane) and columns (lane/K).
    xb = jnp.pad(x.astype(jnp.bfloat16), ((0, B_pad - B), (0, Dp - D)))

    grid = (B_pad // TB,)
    x_spec = pl.BlockSpec((TB, Dp), lambda i: (i, 0))
    compiler_params = pltpu.CompilerParams(
        dimension_semantics=("parallel",),        # v7x: shard batch over 2 TCs
        vmem_limit_bytes=vmem_limit,
    )

    def const_spec(arr, single_buffer):
        # Full array, VMEM-resident across all batch tiles (constant index_map);
        # single-buffered when supported (it is never re-fetched).
        if single_buffer:
            return pl.BlockSpec(arr.shape, lambda i: (0, 0),
                                pipeline_mode=pl.Buffered(1))
        return pl.BlockSpec(arr.shape, lambda i: (0, 0))

    if exit_chosen is None:
        kernel = functools.partial(_all_exits_kernel, hidden_pad=Hp)
        weights = (prep["w0"], prep["b0"], prep["w1e0"], prep["b1e0"],
                   prep["w12"], prep["b12"])
        out_cols = 3 * Cp
    else:
        assert 0 <= exit_chosen <= 2
        if exit_chosen == 0:
            kernel = _single_exit_shallow_kernel
            weights = (prep["w0"], prep["b0"], prep["we0"], prep["be0"])
        else:
            we, be = ("we1", "be1") if exit_chosen == 1 else ("w2", "b2")
            kernel = _single_exit_deep_kernel
            weights = (prep["w0"], prep["b0"], prep["w1"], prep["b1"],
                       prep[we], prep[be])
        out_cols = Cp

    def run(single_buffer):
        return pl.pallas_call(
            kernel,
            out_shape=jax.ShapeDtypeStruct((B_pad, out_cols), jnp.float32),
            grid=grid,
            in_specs=[x_spec] + [const_spec(w, single_buffer) for w in weights],
            out_specs=pl.BlockSpec((TB, out_cols), lambda i: (i, 0)),
            compiler_params=compiler_params,
        )(xb, *weights)

    try:
        out = run(single_buffer=True)
    except Exception:
        # pipeline_mode=pl.Buffered(1) unsupported on this build; fall back to
        # default double-buffered constant specs (correctness unchanged).
        out = run(single_buffer=False)

    if exit_chosen is None:
        # (B, 3*Cp) lane-dense slab -> (B, 3, Cp) view reshape -> slice real C.
        return out[:B].reshape(B, 3, Cp)[:, :, :C]
    return out[:B, :C]


# ---------------------------------------------------------------------------
# Params + pure-JAX reference (same bf16-activation MXU numerics as the kernel)
# ---------------------------------------------------------------------------

def init_params(key, d_in, hidden, n_classes):
    ks = jax.random.split(key, 10)
    scale = 0.1
    w = lambda k, shape: (scale * jax.random.normal(k, shape)).astype(jnp.float32)
    return {
        "w0": w(ks[0], (d_in, hidden)),   "b0": w(ks[1], (1, hidden)),
        "w1": w(ks[2], (hidden, hidden)), "b1": w(ks[3], (1, hidden)),
        "we0": w(ks[4], (hidden, n_classes)), "be0": w(ks[5], (1, n_classes)),
        "we1": w(ks[6], (hidden, n_classes)), "be1": w(ks[7], (1, n_classes)),
        "w2": w(ks[8], (hidden, n_classes)),  "b2": w(ks[9], (1, n_classes)),
    }


def reference_forward(x, params):
    """Mirrors the PyTorch module with the same bf16xbf16 / f32-acc matmuls."""
    bf = jnp.bfloat16

    def dot(a, w):
        return jnp.dot(a.astype(bf), w.astype(bf),
                       preferred_element_type=jnp.float32)

    h0 = jnp.maximum(dot(x, params["w0"]) + params["b0"], 0.0)
    h1 = jnp.maximum(dot(h0, params["w1"]) + params["b1"], 0.0)
    out0 = dot(h0, params["we0"]) + params["be0"]
    out1 = dot(h1, params["we1"]) + params["be1"]
    out2 = dot(h1, params["w2"]) + params["b2"]
    return jnp.stack([out0, out1, out2], axis=1)


if __name__ == "__main__":
    B, D_IN, HIDDEN, N_CLASSES = 2, 32, 32, 16

    key = jax.random.PRNGKey(0)
    k_x, k_p = jax.random.split(key)
    x = jax.random.normal(k_x, (B, D_IN), dtype=jnp.float32)
    params = init_params(k_p, D_IN, HIDDEN, N_CLASSES)
    prep = prepare_params(params)

    # exit_chosen=None path: all exits, stacked along dim=1.
    out_all = jax.block_until_ready(early_exit_forward(x, prep, exit_chosen=None))
    assert out_all.shape == (B, 3, N_CLASSES), out_all.shape

    ref = reference_forward(x, params)
    assert jnp.allclose(out_all, ref, atol=1e-3, rtol=1e-3), "mismatch vs reference"

    # single-exit (truncated) kernels must agree with the corresponding slice.
    for e in range(3):
        out_e = jax.block_until_ready(early_exit_forward(x, prep, exit_chosen=e))
        assert out_e.shape == (B, N_CLASSES), out_e.shape
        assert jnp.allclose(out_e, out_all[:, e, :], atol=1e-3, rtol=1e-3), e

    print("KERNEL_OK")
</pallas_src>

<mosaic_0001>
module attributes {stable_mosaic.version = 11 : i64} {
  func.func @_all_exits_kernel(%arg0: i32, %arg1: memref<8x128xbf16, #tpu.memory_space<vmem>>, %arg2: memref<128x128xbf16, #tpu.memory_space<vmem>>, %arg3: memref<1x128xf32, #tpu.memory_space<vmem>>, %arg4: memref<128x256xbf16, #tpu.memory_space<vmem>>, %arg5: memref<1x256xf32, #tpu.memory_space<vmem>>, %arg6: memref<128x256xbf16, #tpu.memory_space<vmem>>, %arg7: memref<1x256xf32, #tpu.memory_space<vmem>>, %arg8: memref<8x384xf32, #tpu.memory_space<vmem>>) attributes {dimension_semantics = [#tpu.dimension_semantics<parallel>], iteration_bounds = array<i64: 1>, scalar_prefetch = 0 : i64, scratch_operands = 0 : i64, tpu.core_type = #tpu.core_type<tc>, window_params = [{transform_indices = @transform_0, window_bounds = array<i64: 8, 128>}, {pipeline_mode = #tpu.pipeline_mode<synchronous>, transform_indices = @transform_1, window_bounds = array<i64: 128, 128>}, {pipeline_mode = #tpu.pipeline_mode<synchronous>, transform_indices = @transform_2, window_bounds = array<i64: 1, 128>}, {pipeline_mode = #tpu.pipeline_mode<synchronous>, transform_indices = @transform_3, window_bounds = array<i64: 128, 256>}, {pipeline_mode = #tpu.pipeline_mode<synchronous>, transform_indices = @transform_4, window_bounds = array<i64: 1, 256>}, {pipeline_mode = #tpu.pipeline_mode<synchronous>, transform_indices = @transform_5, window_bounds = array<i64: 128, 256>}, {pipeline_mode = #tpu.pipeline_mode<synchronous>, transform_indices = @transform_6, window_bounds = array<i64: 1, 256>}, {transform_indices = @transform_7, window_bounds = array<i64: 8, 384>}]} {
    %c0 = arith.constant 0 : index
    %c0_0 = arith.constant 0 : index
    %0 = vector.load %arg1[%c0, %c0_0] : memref<8x128xbf16, #tpu.memory_space<vmem>>, vector<8x128xbf16>
    %c0_1 = arith.constant 0 : index
    %c0_2 = arith.constant 0 : index
    %1 = vector.load %arg2[%c0_1, %c0_2] : memref<128x128xbf16, #tpu.memory_space<vmem>>, vector<128x128xbf16>
    %cst = arith.constant dense<0.000000e+00> : vector<8x128xf32>
    %2 = tpu.matmul %0, %1, %cst {dimension_numbers = #tpu.dot_dimension_numbers<[1], [0], [0], [1], [0, 0, 1, 1], [], []>} : vector<8x128xbf16>, vector<128x128xbf16>, vector<8x128xf32> -> vector<8x128xf32>
    %c0_3 = arith.constant 0 : index
    %c0_4 = arith.constant 0 : index
    %3 = vector.load %arg3[%c0_3, %c0_4] : memref<1x128xf32, #tpu.memory_space<vmem>>, vector<1x128xf32>
    %4 = vector.broadcast %3 : vector<1x128xf32> to vector<8x128xf32>
    %5 = arith.addf %2, %4 : vector<8x128xf32>
    %cst_5 = arith.constant 0.000000e+00 : f32
    %6 = vector.broadcast %cst_5 : f32 to vector<8x128xf32>
    %7 = arith.maximumf %5, %6 : vector<8x128xf32>
    %8 = arith.truncf %7 : vector<8x128xf32> to vector<8x128xbf16>
    %c0_6 = arith.constant 0 : index
    %c0_7 = arith.constant 0 : index
    %9 = vector.load %arg4[%c0_6, %c0_7] : memref<128x256xbf16, #tpu.memory_space<vmem>>, vector<128x256xbf16>
    %cst_8 = arith.constant dense<0.000000e+00> : vector<8x256xf32>
    %10 = tpu.matmul %8, %9, %cst_8 {dimension_numbers = #tpu.dot_dimension_numbers<[1], [0], [0], [1], [0, 0, 1, 1], [], []>} : vector<8x128xbf16>, vector<128x256xbf16>, vector<8x256xf32> -> vector<8x256xf32>
    %c0_9 = arith.constant 0 : index
    %c0_10 = arith.constant 0 : index
    %11 = vector.load %arg5[%c0_9, %c0_10] : memref<1x256xf32, #tpu.memory_space<vmem>>, vector<1x256xf32>
    %12 = vector.broadcast %11 : vector<1x256xf32> to vector<8x256xf32>
    %13 = arith.addf %10, %12 : vector<8x256xf32>
    %14 = vector.extract_strided_slice %13 {offsets = [0, 0], sizes = [8, 128], strides = [1, 1]} : vector<8x256xf32> to vector<8x128xf32>
    %cst_11 = arith.constant 0.000000e+00 : f32
    %15 = vector.broadcast %cst_11 : f32 to vector<8x128xf32>
    %16 = arith.maximumf %14, %15 : vector<8x128xf32>
    %17 = vector.extract_strided_slice %13 {offsets = [0, 128], sizes = [8, 128], strides = [1, 1]} : vector<8x256xf32> to vector<8x128xf32>
    %18 = arith.truncf %16 : vector<8x128xf32> to vector<8x128xbf16>
    %c0_12 = arith.constant 0 : index
    %c0_13 = arith.constant 0 : index
    %19 = vector.load %arg6[%c0_12, %c0_13] : memref<128x256xbf16, #tpu.memory_space<vmem>>, vector<128x256xbf16>
    %cst_14 = arith.constant dense<0.000000e+00> : vector<8x256xf32>
    %20 = tpu.matmul %18, %19, %cst_14 {dimension_numbers = #tpu.dot_dimension_numbers<[1], [0], [0], [1], [0, 0, 1, 1], [], []>} : vector<8x128xbf16>, vector<128x256xbf16>, vector<8x256xf32> -> vector<8x256xf32>
    %c0_15 = arith.constant 0 : index
    %c0_16 = arith.constant 0 : index
    %21 = vector.load %arg7[%c0_15, %c0_16] : memref<1x256xf32, #tpu.memory_space<vmem>>, vector<1x256xf32>
    %22 = vector.broadcast %21 : vector<1x256xf32> to vector<8x256xf32>
    %23 = arith.addf %20, %22 : vector<8x256xf32>
    %24 = tpu.concatenate %17, %23 in 1 : vector<8x128xf32>, vector<8x256xf32> -> vector<8x384xf32>
    %c0_17 = arith.constant 0 : index
    %c0_18 = arith.constant 0 : index
    %25 = vector.load %arg8[%c0_17, %c0_18] : memref<8x384xf32, #tpu.memory_space<vmem>>, vector<8x384xf32>
    tpu.vector_store %arg8[%c0_17, %c0_18], %24 {strides = array<i32>} : memref<8x384xf32, #tpu.memory_space<vmem>>, vector<8x384xf32>,
    return
  }
  func.func @transform_0(%arg0: i32) -> (i32, i32) {
    %c0_i32 = arith.constant 0 : i32
    %c0_i32_0 = arith.constant 0 : i32
    return %arg0, %c0_i32 : i32, i32
  }
  func.func @transform_1(%arg0: i32) -> (i32, i32) {
    %c0_i32 = arith.constant 0 : i32
    %c0_i32_0 = arith.constant 0 : i32
    %c0_i32_1 = arith.constant 0 : i32
    return %c0_i32, %c0_i32_0 : i32, i32
  }
  func.func @transform_2(%arg0: i32) -> (i32, i32) {
    %c0_i32 = arith.constant 0 : i32
    %c0_i32_0 = arith.constant 0 : i32
    %c0_i32_1 = arith.constant 0 : i32
    return %c0_i32, %c0_i32_0 : i32, i32
  }
  func.func @transform_3(%arg0: i32) -> (i32, i32) {
    %c0_i32 = arith.constant 0 : i32
    %c0_i32_0 = arith.constant 0 : i32
    %c0_i32_1 = arith.constant 0 : i32
    return %c0_i32, %c0_i32_0 : i32, i32
  }
  func.func @transform_4(%arg0: i32) -> (i32, i32) {
    %c0_i32 = arith.constant 0 : i32
    %c0_i32_0 = arith.constant 0 : i32
    %c0_i32_1 = arith.constant 0 : i32
    return %c0_i32, %c0_i32_0 : i32, i32
  }
  func.func @transform_5(%arg0: i32) -> (i32, i32) {
    %c0_i32 = arith.constant 0 : i32
    %c0_i32_0 = arith.constant 0 : i32
    %c0_i32_1 = arith.constant 0 : i32
    return %c0_i32, %c0_i32_0 : i32, i32
  }
  func.func @transform_6(%arg0: i32) -> (i32, i32) {
    %c0_i32 = arith.constant 0 : i32
    %c0_i32_0 = arith.constant 0 : i32
    %c0_i32_1 = arith.constant 0 : i32
    return %c0_i32, %c0_i32_0 : i32, i32
  }
  func.func @transform_7(%arg0: i32) -> (i32, i32) {
    %c0_i32 = arith.constant 0 : i32
    %c0_i32_0 = arith.constant 0 : i32
    return %arg0, %c0_i32 : i32, i32
  }
}

module attributes {stable_mosaic.version = 11 : i64} {
  func.func @_all_exits_kernel(%arg0: i32, %arg1: memref<8x128xbf16, #tpu.memory_space<vmem>>, %arg2: memref<128x128xbf16, #tpu.memory_space<vmem>>, %arg3: memref<1x128xf32, #tpu.memory_space<vmem>>, %arg4: memref<128x256xbf16, #tpu.memory_space<vmem>>, %arg5: memref<1x256xf32, #tpu.memory_space<vmem>>, %arg6: memref<128x256xbf16, #tpu.memory_space<vmem>>, %arg7: memref<1x256xf32, #tpu.memory_space<vmem>>, %arg8: memref<8x384xf32, #tpu.memory_space<vmem>>) attributes {dimension_semantics = [#tpu.dimension_semantics<parallel>], iteration_bounds = array<i64: 1>, scalar_prefetch = 0 : i64, scratch_operands = 0 : i64, tpu.core_type = #tpu.core_type<tc>, window_params = [{transform_indices = @transform_0, window_bounds = array<i64: 8, 128>}, {pipeline_mode = #tpu.pipeline_mode<synchronous>, transform_indices = @transform_1, window_bounds = array<i64: 128, 128>}, {pipeline_mode = #tpu.pipeline_mode<synchronous>, transform_indices = @transform_2, window_bounds = array<i64: 1, 128>}, {pipeline_mode = #tpu.pipeline_mode<synchronous>, transform_indices = @transform_3, window_bounds = array<i64: 128, 256>}, {pipeline_mode = #tpu.pipeline_mode<synchronous>, transform_indices = @transform_4, window_bounds = array<i64: 1, 256>}, {pipeline_mode = #tpu.pipeline_mode<synchronous>, transform_indices = @transform_5, window_bounds = array<i64: 128, 256>}, {pipeline_mode = #tpu.pipeline_mode<synchronous>, transform_indices = @transform_6, window_bounds = array<i64: 1, 256>}, {transform_indices = @transform_7, window_bounds = array<i64: 8, 384>}]} {
    %c0 = arith.constant 0 : index
    %c0_0 = arith.constant 0 : index
    %0 = vector.load %arg1[%c0, %c0_0] : memref<8x128xbf16, #tpu.memory_space<vmem>>, vector<8x128xbf16>
    %c0_1 = arith.constant 0 : index
    %c0_2 = arith.constant 0 : index
    %1 = vector.load %arg2[%c0_1, %c0_2] : memref<128x128xbf16, #tpu.memory_space<vmem>>, vector<128x128xbf16>
    %cst = arith.constant dense<0.000000e+00> : vector<8x128xf32>
    %2 = tpu.matmul %0, %1, %cst {dimension_numbers = #tpu.dot_dimension_numbers<[1], [0], [0], [1], [0, 0, 1, 1], [], []>} : vector<8x128xbf16>, vector<128x128xbf16>, vector<8x128xf32> -> vector<8x128xf32>
    %c0_3 = arith.constant 0 : index
    %c0_4 = arith.constant 0 : index
    %3 = vector.load %arg3[%c0_3, %c0_4] : memref<1x128xf32, #tpu.memory_space<vmem>>, vector<1x128xf32>
    %4 = vector.broadcast %3 : vector<1x128xf32> to vector<8x128xf32>
    %5 = arith.addf %2, %4 : vector<8x128xf32>
    %cst_5 = arith.constant 0.000000e+00 : f32
    %6 = vector.broadcast %cst_5 : f32 to vector<8x128xf32>
    %7 = arith.maximumf %5, %6 : vector<8x128xf32>
    %8 = arith.truncf %7 : vector<8x128xf32> to vector<8x128xbf16>
    %c0_6 = arith.constant 0 : index
    %c0_7 = arith.constant 0 : index
    %9 = vector.load %arg4[%c0_6, %c0_7] : memref<128x256xbf16, #tpu.memory_space<vmem>>, vector<128x256xbf16>
    %cst_8 = arith.constant dense<0.000000e+00> : vector<8x256xf32>
    %10 = tpu.matmul %8, %9, %cst_8 {dimension_numbers = #tpu.dot_dimension_numbers<[1], [0], [0], [1], [0, 0, 1, 1], [], []>} : vector<8x128xbf16>, vector<128x256xbf16>, vector<8x256xf32> -> vector<8x256xf32>
    %c0_9 = arith.constant 0 : index
    %c0_10 = arith.constant 0 : index
    %11 = vector.load %arg5[%c0_9, %c0_10] : memref<1x256xf32, #tpu.memory_space<vmem>>, vector<1x256xf32>
    %12 = vector.broadcast %11 : vector<1x256xf32> to vector<8x256xf32>
    %13 = arith.addf %10, %12 : vector<8x256xf32>
    %14 = vector.extract_strided_slice %13 {offsets = [0, 0], sizes = [8, 128], strides = [1, 1]} : vector<8x256xf32> to vector<8x128xf32>
    %cst_11 = arith.constant 0.000000e+00 : f32
    %15 = vector.broadcast %cst_11 : f32 to vector<8x128xf32>
    %16 = arith.maximumf %14, %15 : vector<8x128xf32>
    %17 = vector.extract_strided_slice %13 {offsets = [0, 128], sizes = [8, 128], strides = [1, 1]} : vector<8x256xf32> to vector<8x128xf32>
    %18 = arith.truncf %16 : vector<8x128xf32> to vector<8x128xbf16>
    %c0_12 = arith.constant 0 : index
    %c0_13 = arith.constant 0 : index
    %19 = vector.load %arg6[%c0_12, %c0_13] : memref<128x256xbf16, #tpu.memory_space<vmem>>, vector<128x256xbf16>
    %cst_14 = arith.constant dense<0.000000e+00> : vector<8x256xf32>
    %20 = tpu.matmul %18, %19, %cst_14 {dimension_numbers = #tpu.dot_dimension_numbers<[1], [0], [0], [1], [0, 0, 1, 1], [], []>} : vector<8x128xbf16>, vector<128x256xbf16>, vector<8x256xf32> -> vector<8x256xf32>
    %c0_15 = arith.constant 0 : index
    %c0_16 = arith.constant 0 : index
    %21 = vector.load %arg7[%c0_15, %c0_16] : memref<1x256xf32, #tpu.memory_space<vmem>>, vector<1x256xf32>
    %22 = vector.broadcast %21 : vector<1x256xf32> to vector<8x256xf32>
    %23 = arith.addf %20, %22 : vector<8x256xf32>
    %24 = tpu.concatenate %17, %23 in 1 : vector<8x128xf32>, vector<8x256xf32> -> vector<8x384xf32>
    %c0_17 = arith.constant 0 : index
    %c0_18 = arith.constant 0 : index
    %25 = vector.load %arg8[%c0_17, %c0_18] : memref<8x384xf32, #tpu.memory_space<vmem>>, vector<8x384xf32>
    tpu.vector_store %arg8[%c0_17, %c0_18], %24 {strides = array<i32>} : memref<8x384xf32, #tpu.memory_space<vmem>>, vector<8x384xf32>,
    return
  }
  func.func @transform_0(%arg0: i32) -> (i32, i32) {
    %c0_i32 = arith.constant 0 : i32
    %c0_i32_0 = arith.constant 0 : i32
    return %arg0, %c0_i32 : i32, i32
  }
  func.func @transform_1(%arg0: i32) -> (i32, i32) {
    %c0_i32 = arith.constant 0 : i32
    %c0_i32_0 = arith.constant 0 : i32
    %c0_i32_1 = arith.constant 0 : i32
    return %c0_i32, %c0_i32_0 : i32, i32
  }
  func.func @transform_2(%arg0: i32) -> (i32, i32) {
    %c0_i32 = arith.constant 0 : i32
    %c0_i32_0 = arith.constant 0 : i32
    %c0_i32_1 = arith.constant 0 : i32
    return %c0_i32, %c0_i32_0 : i32, i32
  }
  func.func @transform_3(%arg0: i32) -> (i32, i32) {
    %c0_i32 = arith.constant 0 : i32
    %c0_i32_0 = arith.constant 0 : i32
    %c0_i32_1 = arith.constant 0 : i32
    return %c0_i32, %c0_i32_0 : i32, i32
  }
  func.func @transform_4(%arg0: i32) -> (i32, i32) {
    %c0_i32 = arith.constant 0 : i32
    %c0_i32_0 = arith.constant 0 : i32
    %c0_i32_1 = arith.constant 0 : i32
    return %c0_i32, %c0_i32_0 : i32, i32
  }
  func.func @transform_5(%arg0: i32) -> (i32, i32) {
    %c0_i32 = arith.constant 0 : i32
    %c0_i32_0 = arith.constant 0 : i32
    %c0_i32_1 = arith.constant 0 : i32
    return %c0_i32, %c0_i32_0 : i32, i32
  }
  func.func @transform_6(%arg0: i32) -> (i32, i32) {
    %c0_i32 = arith.constant 0 : i32
    %c0_i32_0 = arith.constant 0 : i32
    %c0_i32_1 = arith.constant 0 : i32
    return %c0_i32, %c0_i32_0 : i32, i32
  }
  func.func @transform_7(%arg0: i32) -> (i32, i32) {
    %c0_i32 = arith.constant 0 : i32
    %c0_i32_0 = arith.constant 0 : i32
    return %arg0, %c0_i32 : i32, i32
  }
}

</mosaic_0001>

<llo_original>
// kernel: tpu_custom_call.1
$region0: #{tpu_custom_call.1}
  #allocation0 [shape = 'u32[]', space=smem, size = 0x4, offset = 0x4, fixed_abs, tag = 'smem constant byte address 0x4 - core index']
  #allocation1 [shape = 'u32[144,128]{1,0:T(1,128)}', space=vmem, size = 0x12000, scoped, tag = 'internal scratch']
  %s0 = inlined_call_operand.hbm [shape: bf16[8,128], index: 0, kind: input, shape index: {}]
  %s1 = inlined_call_operand.hbm [shape: bf16[128,128], index: 1, kind: input, shape index: {}]
  %s2 = inlined_call_operand.vmem [shape: f32[1,128], index: 2, kind: input, shape index: {}]
  %s3 = inlined_call_operand.hbm [shape: bf16[128,256], index: 3, kind: input, shape index: {}]
  %s4 = inlined_call_operand.vmem [shape: f32[1,256], index: 4, kind: input, shape index: {}]
  %s5 = inlined_call_operand.hbm [shape: bf16[128,256], index: 5, kind: input, shape index: {}]
  %s6 = inlined_call_operand.vmem [shape: f32[1,256], index: 6, kind: input, shape index: {}]
  %s7 = inlined_call_operand.hbm [shape: f32[8,384], index: 7, kind: output, shape index: {}]
  %s8 = sld [smem:[#allocation0]]
  $region54: #{tpu_custom_call.1} parent=0
    _
  %s10 = ssub.s32 1, %s8
  %s11 = scalar_select 0, %s10, %s8
  $region1: #{tpu_custom_call.1} parent=0
    #allocation2 [shape = 'u8[2048]{0}', space=vmem, size = 0x800, scoped, tag = 'input window, operand 0, single buffered']
    #allocation3 [shape = 's32[1]{0}', space=sflag, size = 0x4, scoped, tag = 'scoped memory for tpu_custom_call.1']
    #allocation4 [shape = 's32[1]{0}', space=sflag, size = 0x4, scoped, tag = 'scoped memory for tpu_custom_call.1']
    #allocation5 [shape = 'u8[32768]{0}', space=vmem, size = 0x8000, scoped, tag = 'input window, operand 1, single buffered']
    #allocation6 [shape = 's32[1]{0}', space=sflag, size = 0x4, scoped, tag = 'scoped memory for tpu_custom_call.1']
    #allocation7 [shape = 'u8[65536]{0}', space=vmem, size = 0x10000, scoped, tag = 'input window, operand 3, single buffered']
    #allocation8 [shape = 'u8[65536]{0}', space=vmem, size = 0x10000, scoped, tag = 'input window, operand 5, single buffered']
    #allocation9 [shape = 's32[1]{0}', space=sflag, size = 0x4, scoped, tag = 'scoped memory for tpu_custom_call.1']
    #allocation10 [shape = 'u8[12288]{0}', space=vmem, size = 0x3000, scoped, tag = 'output window, operand 0, single buffered']
    %12 = vsyncpa [#allocation3], 0
    %13 = vsyncpa [#allocation6], 0
    %14 = vsyncpa [#allocation9], 0
    %15 = vsyncpa [#allocation4], 0
    // Predicated region
    $region2: #{tpu_custom_call.1} parent=1 // pred_check
      _
    $region3: #{tpu_custom_call.1} parent=1 // pred_check_branch
      %17 = sbr.rel (0) target = $region5
    $region4: #{tpu_custom_call.1} parent=1 // pred_region
      %s19 = ssub.s32 64, 64
      %20 = vsyncadd [#allocation3], %s19
      %s22 = sshll.u32 [#allocation2], 4
      %s23 = int_to_ptr.vmem [resolvable:$true] %s22
      %25 = dma.hbm_to_vmem [thread:$0]  %s0, 64, %s23, [#allocation3]
    $region5: #{tpu_custom_call.1} parent=1 // pred_fallthru
      _
    // Predicated region
    $region6: #{tpu_custom_call.1} parent=1 // pred_check
      _
    $region7: #{tpu_custom_call.1} parent=1 // pred_check_branch
      %27 = sbr.rel (0) target = $region9
    $region8: #{tpu_custom_call.1} parent=1 // pred_region
      %s29 = ssub.s32 1024, 1024
      %30 = vsyncadd [#allocation6], %s29
      %s31 = sshll.u32 [#allocation5], 4
      %s32 = int_to_ptr.vmem [resolvable:$true] %s31
      %37 = dma.hbm_to_vmem [thread:$0]  %s1, 1024, %s32, [#allocation6], 64, 64, 4
    $region9: #{tpu_custom_call.1} parent=1 // pred_fallthru
      _
    // Predicated region
    $region10: #{tpu_custom_call.1} parent=1 // pred_check
      _
    $region11: #{tpu_custom_call.1} parent=1 // pred_check_branch
      %39 = sbr.rel (0) target = $region13
    $region12: #{tpu_custom_call.1} parent=1 // pred_region
      _
    $region13: #{tpu_custom_call.1} parent=1 // pred_fallthru
      _
    // Predicated region
    $region14: #{tpu_custom_call.1} parent=1 // pred_check
      _
    $region15: #{tpu_custom_call.1} parent=1 // pred_check_branch
      %41 = sbr.rel (0) target = $region17
    $region16: #{tpu_custom_call.1} parent=1 // pred_region
      %s43 = ssub.s32 2048, 2048
      %44 = vsyncadd [#allocation6], %s43
      %s45 = sshll.u32 [#allocation7], 4
      %s46 = int_to_ptr.vmem [resolvable:$true] %s45
      %51 = dma.hbm_to_vmem [thread:$0]  %s3, 2048, %s46, [#allocation6], 128, 128, 8
    $region17: #{tpu_custom_call.1} parent=1 // pred_fallthru
      _
    // Predicated region
    $region18: #{tpu_custom_call.1} parent=1 // pred_check
      _
    $region19: #{tpu_custom_call.1} parent=1 // pred_check_branch
      %53 = sbr.rel (0) target = $region21
    $region20: #{tpu_custom_call.1} parent=1 // pred_region
      _
    $region21: #{tpu_custom_call.1} parent=1 // pred_fallthru
      _
    // Predicated region
    $region22: #{tpu_custom_call.1} parent=1 // pred_check
      _
    $region23: #{tpu_custom_call.1} parent=1 // pred_check_branch
      %55 = sbr.rel (0) target = $region25
    $region24: #{tpu_custom_call.1} parent=1 // pred_region
      %s57 = ssub.s32 2048, 2048
      %58 = vsyncadd [#allocation9], %s57
      %s59 = sshll.u32 [#allocation8], 4
      %s60 = int_to_ptr.vmem [resolvable:$true] %s59
      %65 = dma.hbm_to_vmem [thread:$0]  %s5, 2048, %s60, [#allocation9], 128, 128, 8
    $region25: #{tpu_custom_call.1} parent=1 // pred_fallthru
      _
    // Predicated region
    $region26: #{tpu_custom_call.1} parent=1 // pred_check
      _
    $region27: #{tpu_custom_call.1} parent=1 // pred_check_branch
      %67 = sbr.rel (0) target = $region29
    $region28: #{tpu_custom_call.1} parent=1 // pred_region
      _
    $region29: #{tpu_custom_call.1} parent=1 // pred_fallthru
      _
    // Predicated region
    $region30: #{tpu_custom_call.1} parent=1 // pred_check
      _
    $region31: #{tpu_custom_call.1} parent=1 // pred_check_branch
      %69 = sbr.rel (0) target = $region33
    $region32: #{tpu_custom_call.1} parent=1 // pred_region
      %70 = dma.done [#allocation3], 64
    $region33: #{tpu_custom_call.1} parent=1 // pred_fallthru
      _
    // Predicated region
    $region34: #{tpu_custom_call.1} parent=1 // pred_check
      _
    $region35: #{tpu_custom_call.1} parent=1 // pred_check_branch
      %72 = sbr.rel (0) target = $region37
    $region36: #{tpu_custom_call.1} parent=1 // pred_region
      %73 = dma.done [#allocation6], 1024
    $region37: #{tpu_custom_call.1} parent=1 // pred_fallthru
      _
    // Predicated region
    $region38: #{tpu_custom_call.1} parent=1 // pred_check
      _
    $region39: #{tpu_custom_call.1} parent=1 // pred_check_branch
      %75 = sbr.rel (0) target = $region41
    $region40: #{tpu_custom_call.1} parent=1 // pred_region
      %76 = dma.done [#allocation6], 2048
    $region41: #{tpu_custom_call.1} parent=1 // pred_fallthru
      _
    // Predicated region
    $region42: #{tpu_custom_call.1} parent=1 // pred_check
      _
    $region43: #{tpu_custom_call.1} parent=1 // pred_check_branch
      %78 = sbr.rel (0) target = $region45
    $region44: #{tpu_custom_call.1} parent=1 // pred_region
      %79 = dma.done [#allocation9], 2048
    $region45: #{tpu_custom_call.1} parent=1 // pred_fallthru
      _
    %v81 = vld [vmem:[#allocation2] sm:$0xf]
    %v82 = vld [vmem:[#allocation5] sm:$0xf]
    %v83 = vld [vmem:[#allocation5 + $0x4] sm:$0xf]
    %v84 = vld [vmem:[#allocation5 + $0x8] sm:$0xf]
    %v85 = vld [vmem:[#allocation5 + $0xc] sm:$0xf]
    %v86 = vld [vmem:[#allocation5 + $0x10] sm:$0xf]
    %v87 = vld [vmem:[#allocation5 + $0x14] sm:$0xf]
    %v88 = vld [vmem:[#allocation5 + $0x18] sm:$0xf]
    %v89 = vld [vmem:[#allocation5 + $0x1c] sm:$0xf]
    %v90 = vld [vmem:[#allocation5 + $0x20] sm:$0xf]
    %v91 = vld [vmem:[#allocation5 + $0x24] sm:$0xf]
    %v92 = vld [vmem:[#allocation5 + $0x28] sm:$0xf]
    %v93 = vld [vmem:[#allocation5 + $0x2c] sm:$0xf]
    %v94 = vld [vmem:[#allocation5 + $0x30] sm:$0xf]
    %v95 = vld [vmem:[#allocation5 + $0x34] sm:$0xf]
    %v96 = vld [vmem:[#allocation5 + $0x38] sm:$0xf]
    %v97 = vld [vmem:[#allocation5 + $0x3c] sm:$0xf]
    %v98 = vld [vmem:[%s2] sm:$0x1]
    %v100 = vlaneseq
    %v101 = vshrl.u32 %v100, 7
    %v102 = vsub.s32 0, %v101
    %v103 = vrot.slane %v98, %v102
    %v121 = vunpack.c.l.b16 %v82
    %v122 = vunpack.c.l.b16 %v83
    %v123 = vunpack.c.l.b16 %v84
    %v124 = vunpack.c.l.b16 %v85
    %v125 = vunpack.c.l.b16 %v86
    %v126 = vunpack.c.l.b16 %v87
    %v127 = vunpack.c.l.b16 %v88
    %v128 = vunpack.c.l.b16 %v89
    %v129 = vunpack.c.l.b16 %v90
    %v130 = vunpack.c.l.b16 %v91
    %v131 = vunpack.c.l.b16 %v92
    %v132 = vunpack.c.l.b16 %v93
    %v133 = vunpack.c.l.b16 %v94
    %v134 = vunpack.c.l.b16 %v95
    %v135 = vunpack.c.l.b16 %v96
    %v136 = vunpack.c.l.b16 %v97
    %v137 = vpack.c.b16 %v122, %v121
    %v138 = vpack.c.b16 %v124, %v123
    %v139 = vpack.c.b16 %v126, %v125
    %v140 = vpack.c.b16 %v128, %v127
    %v141 = vpack.c.b16 %v130, %v129
    %v142 = vpack.c.b16 %v132, %v131
    %v143 = vpack.c.b16 %v134, %v133
    %v144 = vpack.c.b16 %v136, %v135
    %153 = vmatprep.subr.bf16.mxu0 0
    %154 = vmatpush1.bf16.msra.mxu0 %v137
    %155 = vmatprep.subr.bf16.mxu0 0
    %156 = vmatpush1.bf16.msra.mxu0 %v138
    %157 = vmatprep.subr.bf16.mxu0 0
    %158 = vmatpush1.bf16.msra.mxu0 %v139
    %159 = vmatprep.subr.bf16.mxu0 0
    %160 = vmatpush1.bf16.msra.mxu0 %v140
    %161 = vmatprep.subr.bf16.mxu0 0
    %162 = vmatpush1.bf16.msra.mxu0 %v141
    %163 = vmatprep.subr.bf16.mxu0 0
    %164 = vmatpush1.bf16.msra.mxu0 %v142
    %165 = vmatprep.subr.bf16.mxu0 0
    %166 = vmatpush1.bf16.msra.mxu0 %v143
    %167 = vmatprep.subr.bf16.mxu0 0
    %168 = vmatpush1.bf16.msra.mxu0 %v144
    %169 = vmatprep.subr.bf16.mxu0 0
    %170 = vmatpush1.bf16.msra.mxu0 0
    %171 = vmatprep.subr.bf16.mxu0 0
    %172 = vmatpush1.bf16.msra.mxu0 0
    %173 = vmatprep.subr.bf16.mxu0 0
    %174 = vmatpush1.bf16.msra.mxu0 0
    %175 = vmatprep.subr.bf16.mxu0 0
    %176 = vmatpush1.bf16.msra.mxu0 0
    %177 = vmatprep.subr.bf16.mxu0 0
    %178 = vmatpush1.bf16.msra.mxu0 0
    %179 = vmatprep.subr.bf16.mxu0 0
    %180 = vmatpush1.bf16.msra.mxu0 0
    %181 = vmatprep.subr.bf16.mxu0 0
    %182 = vmatpush1.bf16.msra.mxu0 0
    %183 = vmatprep.subr.bf16.mxu0 0
    %184 = vmatpush1.bf16.msra.mxu0 0
    %185 = vmatprep.mubr.bf16.mxu0 0
    %186 = vmatmul.mubr.bf16.gmra.mrb[0].mxu0 %v81
    %v187 = vpop.f32.mrb[0].mxu0
    %v188 = vadd.f32 %v103, %v187
    %v189 = vpop.f32.mrb[0].mxu0
    %v190 = vpop.f32.mrb[0].mxu0
    %v191 = vpop.f32.mrb[0].mxu0
    %192 = vdwg.mxu0
    %v193 = vmax.f32 %v188, 0.0
    %v194 = vpack.c.bf16 %v193, %v193
    %v195 = vld [vmem:[#allocation7] sm:$0xff]
    %v196 = vld [vmem:[#allocation7 + $0x8] sm:$0xff]
    %v197 = vld [vmem:[#allocation7 + $0x10] sm:$0xff]
    %v198 = vld [vmem:[#allocation7 + $0x18] sm:$0xff]
    %v199 = vld [vmem:[#allocation7 + $0x20] sm:$0xff]
    %v200 = vld [vmem:[#allocation7 + $0x28] sm:$0xff]
    %v201 = vld [vmem:[#allocation7 + $0x30] sm:$0xff]
    %v202 = vld [vmem:[#allocation7 + $0x38] sm:$0xff]
    %v203 = vld [vmem:[#allocation7 + $0x40] sm:$0xff]
    %v204 = vld [vmem:[#allocation7 + $0x48] sm:$0xff]
    %v205 = vld [vmem:[#allocation7 + $0x50] sm:$0xff]
    %v206 = vld [vmem:[#allocation7 + $0x58] sm:$0xff]
    %v207 = vld [vmem:[#allocation7 + $0x60] sm:$0xff]
    %v208 = vld [vmem:[#allocation7 + $0x68] sm:$0xff]
    %v209 = vld [vmem:[#allocation7 + $0x70] sm:$0xff]
    %v210 = vld [vmem:[#allocation7 + $0x78] sm:$0xff]
    %v211 = vld [vmem:[%s4] sm:$0x3]
    %v213 = vlaneseq
    %v214 = vshrl.u32 %v213, 7
    %v215 = vsub.s32 0, %v214
    %v216 = vrot.slane %v211, %v215
    %v217 = vlaneseq
    %v218 = vshrl.u32 %v217, 7
    %v219 = vsub.s32 1, %v218
    %v220 = vrot.slane %v211, %v219
    %v239 = vunpack.c.l.b16 %v195
    %v240 = vunpack.c.h.b16 %v195
    %v241 = vunpack.c.l.b16 %v196
    %v242 = vunpack.c.h.b16 %v196
    %v243 = vunpack.c.l.b16 %v197
    %v244 = vunpack.c.h.b16 %v197
    %v245 = vunpack.c.l.b16 %v198
    %v246 = vunpack.c.h.b16 %v198
    %v247 = vunpack.c.l.b16 %v199
    %v248 = vunpack.c.h.b16 %v199
    %v249 = vunpack.c.l.b16 %v200
    %v250 = vunpack.c.h.b16 %v200
    %v251 = vunpack.c.l.b16 %v201
    %v252 = vunpack.c.h.b16 %v201
    %v253 = vunpack.c.l.b16 %v202
    %v254 = vunpack.c.h.b16 %v202
    %v255 = vunpack.c.l.b16 %v203
    %v256 = vunpack.c.h.b16 %v203
    %v257 = vunpack.c.l.b16 %v204
    %v258 = vunpack.c.h.b16 %v204
    %v259 = vunpack.c.l.b16 %v205
    %v260 = vunpack.c.h.b16 %v205
    %v261 = vunpack.c.l.b16 %v206
    %v262 = vunpack.c.h.b16 %v206
    %v263 = vunpack.c.l.b16 %v207
    %v264 = vunpack.c.h.b16 %v207
    %v265 = vunpack.c.l.b16 %v208
    %v266 = vunpack.c.h.b16 %v208
    %v267 = vunpack.c.l.b16 %v209
    %v268 = vunpack.c.h.b16 %v209
    %v269 = vunpack.c.l.b16 %v210
    %v270 = vunpack.c.h.b16 %v210
    %v271 = vpack.c.b16 %v241, %v239
    %v272 = vpack.c.b16 %v242, %v240
    %v273 = vpack.c.b16 %v245, %v243
    %v274 = vpack.c.b16 %v246, %v244
    %v275 = vpack.c.b16 %v249, %v247
    %v276 = vpack.c.b16 %v250, %v248
    %v277 = vpack.c.b16 %v253, %v251
    %v278 = vpack.c.b16 %v254, %v252
    %v279 = vpack.c.b16 %v257, %v255
    %v280 = vpack.c.b16 %v258, %v256
    %v281 = vpack.c.b16 %v261, %v259
    %v282 = vpack.c.b16 %v262, %v260
    %v283 = vpack.c.b16 %v265, %v263
    %v284 = vpack.c.b16 %v266, %v264
    %v285 = vpack.c.b16 %v269, %v267
    %v286 = vpack.c.b16 %v270, %v268
    %303 = vmatprep.subr.bf16.mxu0 %v272
    %304 = vmatpush1.bf16.msra.mxu0 %v271
    %305 = vmatprep.subr.bf16.mxu0 %v274
    %306 = vmatpush1.bf16.msra.mxu0 %v273
    %307 = vmatprep.subr.bf16.mxu0 %v276
    %308 = vmatpush1.bf16.msra.mxu0 %v275
    %309 = vmatprep.subr.bf16.mxu0 %v278
    %310 = vmatpush1.bf16.msra.mxu0 %v277
    %311 = vmatprep.subr.bf16.mxu0 %v280
    %312 = vmatpush1.bf16.msra.mxu0 %v279
    %313 = vmatprep.subr.bf16.mxu0 %v282
    %314 = vmatpush1.bf16.msra.mxu0 %v281
    %315 = vmatprep.subr.bf16.mxu0 %v284
    %316 = vmatpush1.bf16.msra.mxu0 %v283
    %317 = vmatprep.subr.bf16.mxu0 %v286
    %318 = vmatpush1.bf16.msra.mxu0 %v285
    %319 = vmatprep.subr.bf16.mxu0 0
    %320 = vmatpush1.bf16.msra.mxu0 0
    %321 = vmatprep.subr.bf16.mxu0 0
    %322 = vmatpush1.bf16.msra.mxu0 0
    %323 = vmatprep.subr.bf16.mxu0 0
    %324 = vmatpush1.bf16.msra.mxu0 0
    %325 = vmatprep.subr.bf16.mxu0 0
    %326 = vmatpush1.bf16.msra.mxu0 0
    %327 = vmatprep.subr.bf16.mxu0 0
    %328 = vmatpush1.bf16.msra.mxu0 0
    %329 = vmatprep.subr.bf16.mxu0 0
    %330 = vmatpush1.bf16.msra.mxu0 0
    %331 = vmatprep.subr.bf16.mxu0 0
    %332 = vmatpush1.bf16.msra.mxu0 0
    %333 = vmatprep.subr.bf16.mxu0 0
    %334 = vmatpush1.bf16.msra.mxu0 0
    %335 = vmatprep.mubr.bf16.mxu0 0
    %336 = vmatmul.mubr.bf16.gmra.mrb[0].mxu0 %v194
    %v337 = vpop.f32.mrb[0].mxu0
    %v338 = vadd.f32 %v216, %v337
    %v339 = vpop.f32.mrb[0].mxu0
    %v340 = vadd.f32 %v220, %v339
    %v341 = vpop.f32.mrb[0].mxu0
    %v342 = vpop.f32.mrb[0].mxu0
    %343 = vdwg.mxu0
    %v344 = vmax.f32 %v338, 0.0
    %v345 = vpack.c.bf16 %v344, %v344
    %v346 = vld [vmem:[#allocation8] sm:$0xff]
    %v347 = vld [vmem:[#allocation8 + $0x8] sm:$0xff]
    %v348 = vld [vmem:[#allocation8 + $0x10] sm:$0xff]
    %v349 = vld [vmem:[#allocation8 + $0x18] sm:$0xff]
    %v350 = vld [vmem:[#allocation8 + $0x20] sm:$0xff]
    %v351 = vld [vmem:[#allocation8 + $0x28] sm:$0xff]
    %v352 = vld [vmem:[#allocation8 + $0x30] sm:$0xff]
    %v353 = vld [vmem:[#allocation8 + $0x38] sm:$0xff]
    %v354 = vld [vmem:[#allocation8 + $0x40] sm:$0xff]
    %v355 = vld [vmem:[#allocation8 + $0x48] sm:$0xff]
    %v356 = vld [vmem:[#allocation8 + $0x50] sm:$0xff]
    %v357 = vld [vmem:[#allocation8 + $0x58] sm:$0xff]
    %v358 = vld [vmem:[#allocation8 + $0x60] sm:$0xff]
    %v359 = vld [vmem:[#allocation8 + $0x68] sm:$0xff]
    %v360 = vld [vmem:[#allocation8 + $0x70] sm:$0xff]
    %v361 = vld [vmem:[#allocation8 + $0x78] sm:$0xff]
    %v362 = vld [vmem:[%s6] sm:$0x3]
    %v364 = vlaneseq
    %v365 = vshrl.u32 %v364, 7
    %v366 = vsub.s32 0, %v365
    %v367 = vrot.slane %v362, %v366
    %v368 = vlaneseq
    %v369 = vshrl.u32 %v368, 7
    %v370 = vsub.s32 1, %v369
    %v371 = vrot.slane %v362, %v370
    %v390 = vunpack.c.l.b16 %v346
    %v391 = vunpack.c.h.b16 %v346
    %v392 = vunpack.c.l.b16 %v347
    %v393 = vunpack.c.h.b16 %v347
    %v394 = vunpack.c.l.b16 %v348
    %v395 = vunpack.c.h.b16 %v348
    %v396 = vunpack.c.l.b16 %v349
    %v397 = vunpack.c.h.b16 %v349
    %v398 = vunpack.c.l.b16 %v350
    %v399 = vunpack.c.h.b16 %v350
    %v400 = vunpack.c.l.b16 %v351
    %v401 = vunpack.c.h.b16 %v351
    %v402 = vunpack.c.l.b16 %v352
    %v403 = vunpack.c.h.b16 %v352
    %v404 = vunpack.c.l.b16 %v353
    %v405 = vunpack.c.h.b16 %v353
    %v406 = vunpack.c.l.b16 %v354
    %v407 = vunpack.c.h.b16 %v354
    %v408 = vunpack.c.l.b16 %v355
    %v409 = vunpack.c.h.b16 %v355
    %v410 = vunpack.c.l.b16 %v356
    %v411 = vunpack.c.h.b16 %v356
    %v412 = vunpack.c.l.b16 %v357
    %v413 = vunpack.c.h.b16 %v357
    %v414 = vunpack.c.l.b16 %v358
    %v415 = vunpack.c.h.b16 %v358
    %v416 = vunpack.c.l.b16 %v359
    %v417 = vunpack.c.h.b16 %v359
    %v418 = vunpack.c.l.b16 %v360
    %v419 = vunpack.c.h.b16 %v360
    %v420 = vunpack.c.l.b16 %v361
    %v421 = vunpack.c.h.b16 %v361
    %v422 = vpack.c.b16 %v392, %v390
    %v423 = vpack.c.b16 %v393, %v391
    %v424 = vpack.c.b16 %v396, %v394
    %v425 = vpack.c.b16 %v397, %v395
    %v426 = vpack.c.b16 %v400, %v398
    %v427 = vpack.c.b16 %v401, %v399
    %v428 = vpack.c.b16 %v404, %v402
    %v429 = vpack.c.b16 %v405, %v403
    %v430 = vpack.c.b16 %v408, %v406
    %v431 = vpack.c.b16 %v409, %v407
    %v432 = vpack.c.b16 %v412, %v410
    %v433 = vpack.c.b16 %v413, %v411
    %v434 = vpack.c.b16 %v416, %v414
    %v435 = vpack.c.b16 %v417, %v415
    %v436 = vpack.c.b16 %v420, %v418
    %v437 = vpack.c.b16 %v421, %v419
    %454 = vmatprep.subr.bf16.mxu0 %v423
    %455 = vmatpush1.bf16.msra.mxu0 %v422
    %456 = vmatprep.subr.bf16.mxu0 %v425
    %457 = vmatpush1.bf16.msra.mxu0 %v424
    %458 = vmatprep.subr.bf16.mxu0 %v427
    %459 = vmatpush1.bf16.msra.mxu0 %v426
    %460 = vmatprep.subr.bf16.mxu0 %v429
    %461 = vmatpush1.bf16.msra.mxu0 %v428
    %462 = vmatprep.subr.bf16.mxu0 %v431
    %463 = vmatpush1.bf16.msra.mxu0 %v430
    %464 = vmatprep.subr.bf16.mxu0 %v433
    %465 = vmatpush1.bf16.msra.mxu0 %v432
    %466 = vmatprep.subr.bf16.mxu0 %v435
    %467 = vmatpush1.bf16.msra.mxu0 %v434
    %468 = vmatprep.subr.bf16.mxu0 %v437
    %469 = vmatpush1.bf16.msra.mxu0 %v436
    %470 = vmatprep.subr.bf16.mxu0 0
    %471 = vmatpush1.bf16.msra.mxu0 0
    %472 = vmatprep.subr.bf16.mxu0 0
    %473 = vmatpush1.bf16.msra.mxu0 0
    %474 = vmatprep.subr.bf16.mxu0 0
    %475 = vmatpush1.bf16.msra.mxu0 0
    %476 = vmatprep.subr.bf16.mxu0 0
    %477 = vmatpush1.bf16.msra.mxu0 0
    %478 = vmatprep.subr.bf16.mxu0 0
    %479 = vmatpush1.bf16.msra.mxu0 0
    %480 = vmatprep.subr.bf16.mxu0 0
    %481 = vmatpush1.bf16.msra.mxu0 0
    %482 = vmatprep.subr.bf16.mxu0 0
    %483 = vmatpush1.bf16.msra.mxu0 0
    %484 = vmatprep.subr.bf16.mxu0 0
    %485 = vmatpush1.bf16.msra.mxu0 0
    %486 = vmatprep.mubr.bf16.mxu0 0
    %487 = vmatmul.mubr.bf16.gmra.mrb[0].mxu0 %v345
    %v488 = vpop.f32.mrb[0].mxu0
    %v489 = vadd.f32 %v367, %v488
    %v490 = vpop.f32.mrb[0].mxu0
    %v491 = vadd.f32 %v371, %v490
    %v492 = vpop.f32.mrb[0].mxu0
    %v493 = vpop.f32.mrb[0].mxu0
    %494 = vdwg.mxu0
    %495 = vst [vmem:[#allocation10] sm:$0xff] %v340
    %496 = vst [vmem:[#allocation10 + $0x8] sm:$0xff] %v489
    %497 = vst [vmem:[#allocation10 + $0x10] sm:$0xff] %v491
    // Predicated region
    $region46: #{tpu_custom_call.1} parent=1 // pred_check
      _
    $region47: #{tpu_custom_call.1} parent=1 // pred_check_branch
      %499 = sbr.rel (0) target = $region49
    $region48: #{tpu_custom_call.1} parent=1 // pred_region
      %s501 = ssub.s32 384, 384
      %502 = vsyncadd [#allocation4], %s501
      %s504 = sshll.u32 [#allocation10], 4
      %s505 = int_to_ptr.vmem [resolvable:$true] %s504
      %507 = dma.vmem_to_hbm [thread:$0]  %s505, 384, %s7, [#allocation4]
    $region49: #{tpu_custom_call.1} parent=1 // pred_fallthru
      _
    // Predicated region
    $region50: #{tpu_custom_call.1} parent=1 // pred_check
      _
    $region51: #{tpu_custom_call.1} parent=1 // pred_check_branch
      %509 = sbr.rel (0) target = $region53
    $region52: #{tpu_custom_call.1} parent=1 // pred_region
      %510 = dma.done [#allocation4], 384
    $region53: #{tpu_custom_call.1} parent=1 // pred_fallthru
      _
    %511 = vsyncpa [#allocation3], 1
    %512 = vsyncpa [#allocation6], 1
    %513 = vsyncpa [#allocation9], 1
    %514 = vsyncpa [#allocation4], 1

// kernel: tpu_custom_call.1
$region0: #{tpu_custom_call.1}
  #allocation0 [shape = 'u32[]', space=smem, size = 0x4, offset = 0x4, fixed_abs, tag = 'smem constant byte address 0x4 - core index']
  #allocation1 [shape = 'u32[144,128]{1,0:T(1,128)}', space=vmem, size = 0x12000, scoped, tag = 'internal scratch']
  %s0 = inlined_call_operand.hbm [shape: bf16[8,128], index: 0, kind: input, shape index: {}]
  %s1 = inlined_call_operand.hbm [shape: bf16[128,128], index: 1, kind: input, shape index: {}]
  %s2 = inlined_call_operand.vmem [shape: f32[1,128], index: 2, kind: input, shape index: {}]
  %s3 = inlined_call_operand.hbm [shape: bf16[128,256], index: 3, kind: input, shape index: {}]
  %s4 = inlined_call_operand.vmem [shape: f32[1,256], index: 4, kind: input, shape index: {}]
  %s5 = inlined_call_operand.hbm [shape: bf16[128,256], index: 5, kind: input, shape index: {}]
  %s6 = inlined_call_operand.vmem [shape: f32[1,256], index: 6, kind: input, shape index: {}]
  %s7 = inlined_call_operand.hbm [shape: f32[8,384], index: 7, kind: output, shape index: {}]
  %s8 = sld [smem:[#allocation0]]
  $region54: #{tpu_custom_call.1} parent=0
    _
  %s10 = ssub.s32 1, %s8
  %s11 = scalar_select 0, %s10, %s8
  $region1: #{tpu_custom_call.1} parent=0
    #allocation2 [shape = 'u8[2048]{0}', space=vmem, size = 0x800, scoped, tag = 'input window, operand 0, single buffered']
    #allocation3 [shape = 's32[1]{0}', space=sflag, size = 0x4, scoped, tag = 'scoped memory for tpu_custom_call.1']
    #allocation4 [shape = 's32[1]{0}', space=sflag, size = 0x4, scoped, tag = 'scoped memory for tpu_custom_call.1']
    #allocation5 [shape = 'u8[32768]{0}', space=vmem, size = 0x8000, scoped, tag = 'input window, operand 1, single buffered']
    #allocation6 [shape = 's32[1]{0}', space=sflag, size = 0x4, scoped, tag = 'scoped memory for tpu_custom_call.1']
    #allocation7 [shape = 'u8[65536]{0}', space=vmem, size = 0x10000, scoped, tag = 'input window, operand 3, single buffered']
    #allocation8 [shape = 'u8[65536]{0}', space=vmem, size = 0x10000, scoped, tag = 'input window, operand 5, single buffered']
    #allocation9 [shape = 's32[1]{0}', space=sflag, size = 0x4, scoped, tag = 'scoped memory for tpu_custom_call.1']
    #allocation10 [shape = 'u8[12288]{0}', space=vmem, size = 0x3000, scoped, tag = 'output window, operand 0, single buffered']
    %12 = vsyncpa [#allocation3], 0
    %13 = vsyncpa [#allocation6], 0
    %14 = vsyncpa [#allocation9], 0
    %15 = vsyncpa [#allocation4], 0
    // Predicated region
    $region2: #{tpu_custom_call.1} parent=1 // pred_check
      _
    $region3: #{tpu_custom_call.1} parent=1 // pred_check_branch
      %17 = sbr.rel (0) target = $region5
    $region4: #{tpu_custom_call.1} parent=1 // pred_region
      %s19 = ssub.s32 64, 64
      %20 = vsyncadd [#allocation3], %s19
      %s22 = sshll.u32 [#allocation2], 4
      %s23 = int_to_ptr.vmem [resolvable:$true] %s22
      %25 = dma.hbm_to_vmem [thread:$0]  %s0, 64, %s23, [#allocation3]
    $region5: #{tpu_custom_call.1} parent=1 // pred_fallthru
      _
    // Predicated region
    $region6: #{tpu_custom_call.1} parent=1 // pred_check
      _
    $region7: #{tpu_custom_call.1} parent=1 // pred_check_branch
      %27 = sbr.rel (0) target = $region9
    $region8: #{tpu_custom_call.1} parent=1 // pred_region
      %s29 = ssub.s32 1024, 1024
      %30 = vsyncadd [#allocation6], %s29
      %s31 = sshll.u32 [#allocation5], 4
      %s32 = int_to_ptr.vmem [resolvable:$true] %s31
      %37 = dma.hbm_to_vmem [thread:$0]  %s1, 1024, %s32, [#allocation6], 64, 64, 4
    $region9: #{tpu_custom_call.1} parent=1 // pred_fallthru
      _
    // Predicated region
    $region10: #{tpu_custom_call.1} parent=1 // pred_check
      _
    $region11: #{tpu_custom_call.1} parent=1 // pred_check_branch
      %39 = sbr.rel (0) target = $region13
    $region12: #{tpu_custom_call.1} parent=1 // pred_region
      _
    $region13: #{tpu_custom_call.1} parent=1 // pred_fallthru
      _
    // Predicated region
    $region14: #{tpu_custom_call.1} parent=1 // pred_check
      _
    $region15: #{tpu_custom_call.1} parent=1 // pred_check_branch
      %41 = sbr.rel (0) target = $region17
    $region16: #{tpu_custom_call.1} parent=1 // pred_region
      %s43 = ssub.s32 2048, 2048
      %44 = vsyncadd [#allocation6], %s43
      %s45 = sshll.u32 [#allocation7], 4
      %s46 = int_to_ptr.vmem [resolvable:$true] %s45
      %51 = dma.hbm_to_vmem [thread:$0]  %s3, 2048, %s46, [#allocation6], 128, 128, 8
    $region17: #{tpu_custom_call.1} parent=1 // pred_fallthru
      _
    // Predicated region
    $region18: #{tpu_custom_call.1} parent=1 // pred_check
      _
    $region19: #{tpu_custom_call.1} parent=1 // pred_check_branch
      %53 = sbr.rel (0) target = $region21
    $region20: #{tpu_custom_call.1} parent=1 // pred_region
      _
    $region21: #{tpu_custom_call.1} parent=1 // pred_fallthru
      _
    // Predicated region
    $region22: #{tpu_custom_call.1} parent=1 // pred_check
      _
    $region23: #{tpu_custom_call.1} parent=1 // pred_check_branch
      %55 = sbr.rel (0) target = $region25
    $region24: #{tpu_custom_call.1} parent=1 // pred_region
      %s57 = ssub.s32 2048, 2048
      %58 = vsyncadd [#allocation9], %s57
      %s59 = sshll.u32 [#allocation8], 4
      %s60 = int_to_ptr.vmem [resolvable:$true] %s59
      %65 = dma.hbm_to_vmem [thread:$0]  %s5, 2048, %s60, [#allocation9], 128, 128, 8
    $region25: #{tpu_custom_call.1} parent=1 // pred_fallthru
      _
    // Predicated region
    $region26: #{tpu_custom_call.1} parent=1 // pred_check
      _
    $region27: #{tpu_custom_call.1} parent=1 // pred_check_branch
      %67 = sbr.rel (0) target = $region29
    $region28: #{tpu_custom_call.1} parent=1 // pred_region
      _
    $region29: #{tpu_custom_call.1} parent=1 // pred_fallthru
      _
    // Predicated region
    $region30: #{tpu_custom_call.1} parent=1 // pred_check
      _
    $region31: #{tpu_custom_call.1} parent=1 // pred_check_branch
      %69 = sbr.rel (0) target = $region33
    $region32: #{tpu_custom_call.1} parent=1 // pred_region
      %70 = dma.done [#allocation3], 64
    $region33: #{tpu_custom_call.1} parent=1 // pred_fallthru
      _
    // Predicated region
    $region34: #{tpu_custom_call.1} parent=1 // pred_check
      _
    $region35: #{tpu_custom_call.1} parent=1 // pred_check_branch
      %72 = sbr.rel (0) target = $region37
    $region36: #{tpu_custom_call.1} parent=1 // pred_region
      %73 = dma.done [#allocation6], 1024
    $region37: #{tpu_custom_call.1} parent=1 // pred_fallthru
      _
    // Predicated region
    $region38: #{tpu_custom_call.1} parent=1 // pred_check
      _
    $region39: #{tpu_custom_call.1} parent=1 // pred_check_branch
      %75 = sbr.rel (0) target = $region41
    $region40: #{tpu_custom_call.1} parent=1 // pred_region
      %76 = dma.done [#allocation6], 2048
    $region41: #{tpu_custom_call.1} parent=1 // pred_fallthru
      _
    // Predicated region
    $region42: #{tpu_custom_call.1} parent=1 // pred_check
      _
    $region43: #{tpu_custom_call.1} parent=1 // pred_check_branch
      %78 = sbr.rel (0) target = $region45
    $region44: #{tpu_custom_call.1} parent=1 // pred_region
      %79 = dma.done [#allocation9], 2048
    $region45: #{tpu_custom_call.1} parent=1 // pred_fallthru
      _
    %v81 = vld [vmem:[#allocation2] sm:$0xf]
    %v82 = vld [vmem:[#allocation5] sm:$0xf]
    %v83 = vld [vmem:[#allocation5 + $0x4] sm:$0xf]
    %v84 = vld [vmem:[#allocation5 + $0x8] sm:$0xf]
    %v85 = vld [vmem:[#allocation5 + $0xc] sm:$0xf]
    %v86 = vld [vmem:[#allocation5 + $0x10] sm:$0xf]
    %v87 = vld [vmem:[#allocation5 + $0x14] sm:$0xf]
    %v88 = vld [vmem:[#allocation5 + $0x18] sm:$0xf]
    %v89 = vld [vmem:[#allocation5 + $0x1c] sm:$0xf]
    %v90 = vld [vmem:[#allocation5 + $0x20] sm:$0xf]
    %v91 = vld [vmem:[#allocation5 + $0x24] sm:$0xf]
    %v92 = vld [vmem:[#allocation5 + $0x28] sm:$0xf]
    %v93 = vld [vmem:[#allocation5 + $0x2c] sm:$0xf]
    %v94 = vld [vmem:[#allocation5 + $0x30] sm:$0xf]
    %v95 = vld [vmem:[#allocation5 + $0x34] sm:$0xf]
    %v96 = vld [vmem:[#allocation5 + $0x38] sm:$0xf]
    %v97 = vld [vmem:[#allocation5 + $0x3c] sm:$0xf]
    %v98 = vld [vmem:[%s2] sm:$0x1]
    %v100 = vlaneseq
    %v101 = vshrl.u32 %v100, 7
    %v102 = vsub.s32 0, %v101
    %v103 = vrot.slane %v98, %v102
    %v121 = vunpack.c.l.b16 %v82
    %v122 = vunpack.c.l.b16 %v83
    %v123 = vunpack.c.l.b16 %v84
    %v124 = vunpack.c.l.b16 %v85
    %v125 = vunpack.c.l.b16 %v86
    %v126 = vunpack.c.l.b16 %v87
    %v127 = vunpack.c.l.b16 %v88
    %v128 = vunpack.c.l.b16 %v89
    %v129 = vunpack.c.l.b16 %v90
    %v130 = vunpack.c.l.b16 %v91
    %v131 = vunpack.c.l.b16 %v92
    %v132 = vunpack.c.l.b16 %v93
    %v133 = vunpack.c.l.b16 %v94
    %v134 = vunpack.c.l.b16 %v95
    %v135 = vunpack.c.l.b16 %v96
    %v136 = vunpack.c.l.b16 %v97
    %v137 = vpack.c.b16 %v122, %v121
    %v138 = vpack.c.b16 %v124, %v123
    %v139 = vpack.c.b16 %v126, %v125
    %v140 = vpack.c.b16 %v128, %v127
    %v141 = vpack.c.b16 %v130, %v129
    %v142 = vpack.c.b16 %v132, %v131
    %v143 = vpack.c.b16 %v134, %v133
    %v144 = vpack.c.b16 %v136, %v135
    %153 = vmatprep.subr.bf16.mxu0 0
    %154 = vmatpush1.bf16.msra.mxu0 %v137
    %155 = vmatprep.subr.bf16.mxu0 0
    %156 = vmatpush1.bf16.msra.mxu0 %v138
    %157 = vmatprep.subr.bf16.mxu0 0
    %158 = vmatpush1.bf16.msra.mxu0 %v139
    %159 = vmatprep.subr.bf16.mxu0 0
    %160 = vmatpush1.bf16.msra.mxu0 %v140
    %161 = vmatprep.subr.bf16.mxu0 0
    %162 = vmatpush1.bf16.msra.mxu0 %v141
    %163 = vmatprep.subr.bf16.mxu0 0
    %164 = vmatpush1.bf16.msra.mxu0 %v142
    %165 = vmatprep.subr.bf16.mxu0 0
    %166 = vmatpush1.bf16.msra.mxu0 %v143
    %167 = vmatprep.subr.bf16.mxu0 0
    %168 = vmatpush1.bf16.msra.mxu0 %v144
    %169 = vmatprep.subr.bf16.mxu0 0
    %170 = vmatpush1.bf16.msra.mxu0 0
    %171 = vmatprep.subr.bf16.mxu0 0
    %172 = vmatpush1.bf16.msra.mxu0 0
    %173 = vmatprep.subr.bf16.mxu0 0
    %174 = vmatpush1.bf16.msra.mxu0 0
    %175 = vmatprep.subr.bf16.mxu0 0
    %176 = vmatpush1.bf16.msra.mxu0 0
    %177 = vmatprep.subr.bf16.mxu0 0
    %178 = vmatpush1.bf16.msra.mxu0 0
    %179 = vmatprep.subr.bf16.mxu0 0
    %180 = vmatpush1.bf16.msra.mxu0 0
    %181 = vmatprep.subr.bf16.mxu0 0
    %182 = vmatpush1.bf16.msra.mxu0 0
    %183 = vmatprep.subr.bf16.mxu0 0
    %184 = vmatpush1.bf16.msra.mxu0 0
    %185 = vmatprep.mubr.bf16.mxu0 0
    %186 = vmatmul.mubr.bf16.gmra.mrb[0].mxu0 %v81
    %v187 = vpop.f32.mrb[0].mxu0
    %v188 = vadd.f32 %v103, %v187
    %v189 = vpop.f32.mrb[0].mxu0
    %v190 = vpop.f32.mrb[0].mxu0
    %v191 = vpop.f32.mrb[0].mxu0
    %192 = vdwg.mxu0
    %v193 = vmax.f32 %v188, 0.0
    %v194 = vpack.c.bf16 %v193, %v193
    %v195 = vld [vmem:[#allocation7] sm:$0xff]
    %v196 = vld [vmem:[#allocation7 + $0x8] sm:$0xff]
    %v197 = vld [vmem:[#allocation7 + $0x10] sm:$0xff]
    %v198 = vld [vmem:[#allocation7 + $0x18] sm:$0xff]
    %v199 = vld [vmem:[#allocation7 + $0x20] sm:$0xff]
    %v200 = vld [vmem:[#allocation7 + $0x28] sm:$0xff]
    %v201 = vld [vmem:[#allocation7 + $0x30] sm:$0xff]
    %v202 = vld [vmem:[#allocation7 + $0x38] sm:$0xff]
    %v203 = vld [vmem:[#allocation7 + $0x40] sm:$0xff]
    %v204 = vld [vmem:[#allocation7 + $0x48] sm:$0xff]
    %v205 = vld [vmem:[#allocation7 + $0x50] sm:$0xff]
    %v206 = vld [vmem:[#allocation7 + $0x58] sm:$0xff]
    %v207 = vld [vmem:[#allocation7 + $0x60] sm:$0xff]
    %v208 = vld [vmem:[#allocation7 + $0x68] sm:$0xff]
    %v209 = vld [vmem:[#allocation7 + $0x70] sm:$0xff]
    %v210 = vld [vmem:[#allocation7 + $0x78] sm:$0xff]
    %v211 = vld [vmem:[%s4] sm:$0x3]
    %v213 = vlaneseq
    %v214 = vshrl.u32 %v213, 7
    %v215 = vsub.s32 0, %v214
    %v216 = vrot.slane %v211, %v215
    %v217 = vlaneseq
    %v218 = vshrl.u32 %v217, 7
    %v219 = vsub.s32 1, %v218
    %v220 = vrot.slane %v211, %v219
    %v239 = vunpack.c.l.b16 %v195
    %v240 = vunpack.c.h.b16 %v195
    %v241 = vunpack.c.l.b16 %v196
    %v242 = vunpack.c.h.b16 %v196
    %v243 = vunpack.c.l.b16 %v197
    %v244 = vunpack.c.h.b16 %v197
    %v245 = vunpack.c.l.b16 %v198
    %v246 = vunpack.c.h.b16 %v198
    %v247 = vunpack.c.l.b16 %v199
    %v248 = vunpack.c.h.b16 %v199
    %v249 = vunpack.c.l.b16 %v200
    %v250 = vunpack.c.h.b16 %v200
    %v251 = vunpack.c.l.b16 %v201
    %v252 = vunpack.c.h.b16 %v201
    %v253 = vunpack.c.l.b16 %v202
    %v254 = vunpack.c.h.b16 %v202
    %v255 = vunpack.c.l.b16 %v203
    %v256 = vunpack.c.h.b16 %v203
    %v257 = vunpack.c.l.b16 %v204
    %v258 = vunpack.c.h.b16 %v204
    %v259 = vunpack.c.l.b16 %v205
    %v260 = vunpack.c.h.b16 %v205
    %v261 = vunpack.c.l.b16 %v206
    %v262 = vunpack.c.h.b16 %v206
    %v263 = vunpack.c.l.b16 %v207
    %v264 = vunpack.c.h.b16 %v207
    %v265 = vunpack.c.l.b16 %v208
    %v266 = vunpack.c.h.b16 %v208
    %v267 = vunpack.c.l.b16 %v209
    %v268 = vunpack.c.h.b16 %v209
    %v269 = vunpack.c.l.b16 %v210
    %v270 = vunpack.c.h.b16 %v210
    %v271 = vpack.c.b16 %v241, %v239
    %v272 = vpack.c.b16 %v242, %v240
    %v273 = vpack.c.b16 %v245, %v243
    %v274 = vpack.c.b16 %v246, %v244
    %v275 = vpack.c.b16 %v249, %v247
    %v276 = vpack.c.b16 %v250, %v248
    %v277 = vpack.c.b16 %v253, %v251
    %v278 = vpack.c.b16 %v254, %v252
    %v279 = vpack.c.b16 %v257, %v255
    %v280 = vpack.c.b16 %v258, %v256
    %v281 = vpack.c.b16 %v261, %v259
    %v282 = vpack.c.b16 %v262, %v260
    %v283 = vpack.c.b16 %v265, %v263
    %v284 = vpack.c.b16 %v266, %v264
    %v285 = vpack.c.b16 %v269, %v267
    %v286 = vpack.c.b16 %v270, %v268
    %303 = vmatprep.subr.bf16.mxu0 %v272
    %304 = vmatpush1.bf16.msra.mxu0 %v271
    %305 = vmatprep.subr.bf16.mxu0 %v274
    %306 = vmatpush1.bf16.msra.mxu0 %v273
    %307 = vmatprep.subr.bf16.mxu0 %v276
    %308 = vmatpush1.bf16.msra.mxu0 %v275
    %309 = vmatprep.subr.bf16.mxu0 %v278
    %310 = vmatpush1.bf16.msra.mxu0 %v277
    %311 = vmatprep.subr.bf16.mxu0 %v280
    %312 = vmatpush1.bf16.msra.mxu0 %v279
    %313 = vmatprep.subr.bf16.mxu0 %v282
    %314 = vmatpush1.bf16.msra.mxu0 %v281
    %315 = vmatprep.subr.bf16.mxu0 %v284
    %316 = vmatpush1.bf16.msra.mxu0 %v283
    %317 = vmatprep.subr.bf16.mxu0 %v286
    %318 = vmatpush1.bf16.msra.mxu0 %v285
    %319 = vmatprep.subr.bf16.mxu0 0
    %320 = vmatpush1.bf16.msra.mxu0 0
    %321 = vmatprep.subr.bf16.mxu0 0
    %322 = vmatpush1.bf16.msra.mxu0 0
    %323 = vmatprep.subr.bf16.mxu0 0
    %324 = vmatpush1.bf16.msra.mxu0 0
    %325 = vmatprep.subr.bf16.mxu0 0
    %326 = vmatpush1.bf16.msra.mxu0 0
    %327 = vmatprep.subr.bf16.mxu0 0
    %328 = vmatpush1.bf16.msra.mxu0 0
    %329 = vmatprep.subr.bf16.mxu0 0
    %330 = vmatpush1.bf16.msra.mxu0 0
    %331 = vmatprep.subr.bf16.mxu0 0
    %332 = vmatpush1.bf16.msra.mxu0 0
    %333 = vmatprep.subr.bf16.mxu0 0
    %334 = vmatpush1.bf16.msra.mxu0 0
    %335 = vmatprep.mubr.bf16.mxu0 0
    %336 = vmatmul.mubr.bf16.gmra.mrb[0].mxu0 %v194
    %v337 = vpop.f32.mrb[0].mxu0
    %v338 = vadd.f32 %v216, %v337
    %v339 = vpop.f32.mrb[0].mxu0
    %v340 = vadd.f32 %v220, %v339
    %v341 = vpop.f32.mrb[0].mxu0
    %v342 = vpop.f32.mrb[0].mxu0
    %343 = vdwg.mxu0
    %v344 = vmax.f32 %v338, 0.0
    %v345 = vpack.c.bf16 %v344, %v344
    %v346 = vld [vmem:[#allocation8] sm:$0xff]
    %v347 = vld [vmem:[#allocation8 + $0x8] sm:$0xff]
    %v348 = vld [vmem:[#allocation8 + $0x10] sm:$0xff]
    %v349 = vld [vmem:[#allocation8 + $0x18] sm:$0xff]
    %v350 = vld [vmem:[#allocation8 + $0x20] sm:$0xff]
    %v351 = vld [vmem:[#allocation8 + $0x28] sm:$0xff]
    %v352 = vld [vmem:[#allocation8 + $0x30] sm:$0xff]
    %v353 = vld [vmem:[#allocation8 + $0x38] sm:$0xff]
    %v354 = vld [vmem:[#allocation8 + $0x40] sm:$0xff]
    %v355 = vld [vmem:[#allocation8 + $0x48] sm:$0xff]
    %v356 = vld [vmem:[#allocation8 + $0x50] sm:$0xff]
    %v357 = vld [vmem:[#allocation8 + $0x58] sm:$0xff]
    %v358 = vld [vmem:[#allocation8 + $0x60] sm:$0xff]
    %v359 = vld [vmem:[#allocation8 + $0x68] sm:$0xff]
    %v360 = vld [vmem:[#allocation8 + $0x70] sm:$0xff]
    %v361 = vld [vmem:[#allocation8 + $0x78] sm:$0xff]
    %v362 = vld [vmem:[%s6] sm:$0x3]
    %v364 = vlaneseq
    %v365 = vshrl.u32 %v364, 7
    %v366 = vsub.s32 0, %v365
    %v367 = vrot.slane %v362, %v366
    %v368 = vlaneseq
    %v369 = vshrl.u32 %v368, 7
    %v370 = vsub.s32 1, %v369
    %v371 = vrot.slane %v362, %v370
    %v390 = vunpack.c.l.b16 %v346
    %v391 = vunpack.c.h.b16 %v346
    %v392 = vunpack.c.l.b16 %v347
    %v393 = vunpack.c.h.b16 %v347
    %v394 = vunpack.c.l.b16 %v348
    %v395 = vunpack.c.h.b16 %v348
    %v396 = vunpack.c.l.b16 %v349
    %v397 = vunpack.c.h.b16 %v349
    %v398 = vunpack.c.l.b16 %v350
    %v399 = vunpack.c.h.b16 %v350
    %v400 = vunpack.c.l.b16 %v351
    %v401 = vunpack.c.h.b16 %v351
    %v402 = vunpack.c.l.b16 %v352
    %v403 = vunpack.c.h.b16 %v352
    %v404 = vunpack.c.l.b16 %v353
    %v405 = vunpack.c.h.b16 %v353
    %v406 = vunpack.c.l.b16 %v354
    %v407 = vunpack.c.h.b16 %v354
    %v408 = vunpack.c.l.b16 %v355
    %v409 = vunpack.c.h.b16 %v355
    %v410 = vunpack.c.l.b16 %v356
    %v411 = vunpack.c.h.b16 %v356
    %v412 = vunpack.c.l.b16 %v357
    %v413 = vunpack.c.h.b16 %v357
    %v414 = vunpack.c.l.b16 %v358
    %v415 = vunpack.c.h.b16 %v358
    %v416 = vunpack.c.l.b16 %v359
    %v417 = vunpack.c.h.b16 %v359
    %v418 = vunpack.c.l.b16 %v360
    %v419 = vunpack.c.h.b16 %v360
    %v420 = vunpack.c.l.b16 %v361
    %v421 = vunpack.c.h.b16 %v361
    %v422 = vpack.c.b16 %v392, %v390
    %v423 = vpack.c.b16 %v393, %v391
    %v424 = vpack.c.b16 %v396, %v394
    %v425 = vpack.c.b16 %v397, %v395
    %v426 = vpack.c.b16 %v400, %v398
    %v427 = vpack.c.b16 %v401, %v399
    %v428 = vpack.c.b16 %v404, %v402
    %v429 = vpack.c.b16 %v405, %v403
    %v430 = vpack.c.b16 %v408, %v406
    %v431 = vpack.c.b16 %v409, %v407
    %v432 = vpack.c.b16 %v412, %v410
    %v433 = vpack.c.b16 %v413, %v411
    %v434 = vpack.c.b16 %v416, %v414
    %v435 = vpack.c.b16 %v417, %v415
    %v436 = vpack.c.b16 %v420, %v418
    %v437 = vpack.c.b16 %v421, %v419
    %454 = vmatprep.subr.bf16.mxu0 %v423
    %455 = vmatpush1.bf16.msra.mxu0 %v422
    %456 = vmatprep.subr.bf16.mxu0 %v425
    %457 = vmatpush1.bf16.msra.mxu0 %v424
    %458 = vmatprep.subr.bf16.mxu0 %v427
    %459 = vmatpush1.bf16.msra.mxu0 %v426
    %460 = vmatprep.subr.bf16.mxu0 %v429
    %461 = vmatpush1.bf16.msra.mxu0 %v428
    %462 = vmatprep.subr.bf16.mxu0 %v431
    %463 = vmatpush1.bf16.msra.mxu0 %v430
    %464 = vmatprep.subr.bf16.mxu0 %v433
    %465 = vmatpush1.bf16.msra.mxu0 %v432
    %466 = vmatprep.subr.bf16.mxu0 %v435
    %467 = vmatpush1.bf16.msra.mxu0 %v434
    %468 = vmatprep.subr.bf16.mxu0 %v437
    %469 = vmatpush1.bf16.msra.mxu0 %v436
    %470 = vmatprep.subr.bf16.mxu0 0
    %471 = vmatpush1.bf16.msra.mxu0 0
    %472 = vmatprep.subr.bf16.mxu0 0
    %473 = vmatpush1.bf16.msra.mxu0 0
    %474 = vmatprep.subr.bf16.mxu0 0
    %475 = vmatpush1.bf16.msra.mxu0 0
    %476 = vmatprep.subr.bf16.mxu0 0
    %477 = vmatpush1.bf16.msra.mxu0 0
    %478 = vmatprep.subr.bf16.mxu0 0
    %479 = vmatpush1.bf16.msra.mxu0 0
    %480 = vmatprep.subr.bf16.mxu0 0
    %481 = vmatpush1.bf16.msra.mxu0 0
    %482 = vmatprep.subr.bf16.mxu0 0
    %483 = vmatpush1.bf16.msra.mxu0 0
    %484 = vmatprep.subr.bf16.mxu0 0
    %485 = vmatpush1.bf16.msra.mxu0 0
    %486 = vmatprep.mubr.bf16.mxu0 0
    %487 = vmatmul.mubr.bf16.gmra.mrb[0].mxu0 %v345
    %v488 = vpop.f32.mrb[0].mxu0
    %v489 = vadd.f32 %v367, %v488
    %v490 = vpop.f32.mrb[0].mxu0
    %v491 = vadd.f32 %v371, %v490
    %v492 = vpop.f32.mrb[0].mxu0
    %v493 = vpop.f32.mrb[0].mxu0
    %494 = vdwg.mxu0
    %495 = vst [vmem:[#allocation10] sm:$0xff] %v340
    %496 = vst [vmem:[#allocation10 + $0x8] sm:$0xff] %v489
    %497 = vst [vmem:[#allocation10 + $0x10] sm:$0xff] %v491
    // Predicated region
    $region46: #{tpu_custom_call.1} parent=1 // pred_check
      _
    $region47: #{tpu_custom_call.1} parent=1 // pred_check_branch
      %499 = sbr.rel (0) target = $region49
    $region48: #{tpu_custom_call.1} parent=1 // pred_region
      %s501 = ssub.s32 384, 384
      %502 = vsyncadd [#allocation4], %s501
      %s504 = sshll.u32 [#allocation10], 4
      %s505 = int_to_ptr.vmem [resolvable:$true] %s504
      %507 = dma.vmem_to_hbm [thread:$0]  %s505, 384, %s7, [#allocation4]
    $region49: #{tpu_custom_call.1} parent=1 // pred_fallthru
      _
    // Predicated region
    $region50: #{tpu_custom_call.1} parent=1 // pred_check
      _
    $region51: #{tpu_custom_call.1} parent=1 // pred_check_branch
      %509 = sbr.rel (0) target = $region53
    $region52: #{tpu_custom_call.1} parent=1 // pred_region
      %510 = dma.done [#allocation4], 384
    $region53: #{tpu_custom_call.1} parent=1 // pred_fallthru
      _
    %511 = vsyncpa [#allocation3], 1
    %512 = vsyncpa [#allocation6], 1
    %513 = vsyncpa [#allocation9], 1
    %514 = vsyncpa [#allocation4], 1

</llo_original>
